<compile_context>
chip_gen: v5e
topology: v5e:2x2
jax: 0.10.0
libtpu: 0.0.40
codegen_flags: <defaults>
</compile_context>

<pallas_src>
import functools

import jax
import jax.numpy as jnp
from jax.experimental import pallas as pl
from jax.experimental.pallas import tpu as pltpu

EPS = 1e-5
GROUPS = 4
KSIZE = 3


def _dwsep_kernel(x_ref, dww_ref, dwb_ref, gamma_ref, beta_ref, pg_ref, bg_ref,
                  pww_ref, pwb_ref, o_ref, xpad_ref, *, H, W, C, O, BT, LPAD):
    HW = H * W
    R = BT * C
    halo = W + 1          # only these columns of the halo are ever read

    # ---- in-kernel halo: zero only the read window, then lane-aligned interior copy ----
    # scratch layout: [LPAD-halo, LPAD) zeros | [LPAD, LPAD+HW) = x | [LPAD+HW, LPAD+HW+halo) zeros
    xpad_ref[:, LPAD - halo:LPAD] = jnp.zeros((R, halo), jnp.float32)
    xpad_ref[:, LPAD + HW:LPAD + HW + halo] = jnp.zeros((R, halo), jnp.float32)
    xpad_ref[:, LPAD:LPAD + HW] = x_ref[...].astype(jnp.float32)

    # Column-validity masks (lane-only; row validity is handled by the zero halo).
    if W & (W - 1) == 0:   # power-of-two width: column index = p & (W-1), flat iota
        col = jax.lax.broadcasted_iota(jnp.int32, (1, HW), 1) & (W - 1)
    else:
        col = jax.lax.broadcasted_iota(jnp.int32, (H, W), 1).reshape(1, HW)
    m_left = col >= 1            # neighbour at dw = -1 exists
    m_right = col <= (W - 2)     # neighbour at dw = +1 exists

    dww = dww_ref[...].astype(jnp.float32)           # (R, 9), taps on lanes

    # ---- 3x3 depthwise conv: 9 lane-dense shifted FMAs, only 2 selects total ----
    acc_l = jnp.zeros((R, HW), jnp.float32)          # dw = -1 taps
    acc_c = jnp.zeros((R, HW), jnp.float32)          # dw =  0 taps
    acc_r = jnp.zeros((R, HW), jnp.float32)          # dw = +1 taps
    for kh in range(KSIZE):
        base = LPAD + (kh - 1) * W
        t = kh * KSIZE
        acc_l = acc_l + xpad_ref[:, base - 1:base - 1 + HW] * dww[:, t + 0:t + 1]
        acc_c = acc_c + xpad_ref[:, base:base + HW] * dww[:, t + 1:t + 2]
        acc_r = acc_r + xpad_ref[:, base + 1:base + 1 + HW] * dww[:, t + 2:t + 3]
    acc = (acc_c
           + jnp.where(m_left, acc_l, 0.0)
           + jnp.where(m_right, acc_r, 0.0)
           + dwb_ref[...].astype(jnp.float32))       # (R, 1) bias broadcast

    # ---- GroupNorm(4, C): single-pass f32 stats + low-rank group aggregation ----
    s1 = jnp.sum(acc, axis=1, keepdims=True)         # (R, 1)
    s2 = jnp.sum(acc * acc, axis=1, keepdims=True)   # (R, 1)
    # Pack [s1 | s2] into one (R, 2) operand without a minor-dim concat.
    lane2 = jax.lax.broadcasted_iota(jnp.int32, (1, 2), 1)
    stats = jnp.where(lane2 == 0, s1, s2)            # (R, 2)
    pg = pg_ref[...].astype(jnp.float32)             # (G, R) one-hot / (cg*HW)
    bg = bg_ref[...].astype(jnp.float32)             # (R, G) one-hot broadcast-back
    gstats = jnp.dot(pg, stats, preferred_element_type=jnp.float32)   # (G, 2)
    rstats = jnp.dot(bg, gstats, preferred_element_type=jnp.float32)  # (R, 2)
    mean = rstats[:, 0:1]
    var = rstats[:, 1:2] - mean * mean
    inv = jax.lax.rsqrt(var + EPS)
    gamma = gamma_ref[...].astype(jnp.float32)       # (R, 1)
    beta = beta_ref[...].astype(jnp.float32)         # (R, 1)
    yn = (acc - mean) * (inv * gamma) + beta         # (R, HW)

    # ---- 1x1 pointwise conv: (O, C) x (C, H*W) MXU matmul, lane-dense store ----
    pww = pww_ref[...].astype(jnp.float32)           # (O, C)
    pwb = pwb_ref[...].astype(jnp.float32)           # (O, 1)
    for b in range(BT):
        yb = yn[b * C:(b + 1) * C, :]                # (C, HW)
        ob = jnp.dot(pww, yb, preferred_element_type=jnp.float32) + pwb
        o_ref[b * O:(b + 1) * O, :] = ob.astype(o_ref.dtype)


def _footprint_bytes(bt, C, O, HW, lpad):
    """Rough per-step VMEM footprint (double-buffered blocks + scratch + params)."""
    R = bt * C
    G = bt * GROUPS
    x_blk = 2 * R * HW * 4
    o_blk = 2 * bt * O * HW * 4
    scratch = R * (HW + 2 * lpad) * 4
    params = 2 * (R * (KSIZE * KSIZE) + 4 * R + 2 * R * G + O * C + O) * 4
    return x_blk + o_blk + scratch + params


def _pick_batch_tile(B, C, O, HW, lpad, vmem_budget_bytes):
    """Largest batch tile dividing B whose per-step footprint fits the budget and whose
    row blocks are sublane-aligned (or cover the full array).  No >=2-step constraint:
    on single-TC chips extra grid steps are pure overhead."""
    cands = [bt for bt in range(B, 0, -1)
             if B % bt == 0
             and (bt == B or ((bt * C) % 8 == 0 and (bt * O) % 8 == 0))]
    for bt in cands:
        if _footprint_bytes(bt, C, O, HW, lpad) <= vmem_budget_bytes:
            return bt
    return cands[-1]   # smallest aligned tile; may exceed budget (best effort)


def depthwise_conv2d_block(x, dww, dwb, gamma, beta, pww, pwb, *,
                           batch_tile=None, vmem_budget_bytes=40 * 1024 * 1024):
    """x: (B, C, H, W) float32 NCHW.  Returns (B, O, H, W)."""
    B, C, H, W = x.shape
    O = pww.shape[0]
    assert C % GROUPS == 0
    HW = H * W
    cg = C // GROUPS
    lpad = ((W + 1 + 127) // 128) * 128      # lane-aligned interior offset (>= W+1)

    bt = (_pick_batch_tile(B, C, O, HW, lpad, vmem_budget_bytes)
          if batch_tile is None else batch_tile)
    assert B % bt == 0
    R = bt * C
    G = bt * GROUPS
    fp = _footprint_bytes(bt, C, O, HW, lpad)

    # Free row-major reshape: activations as (rows, H*W) -> lane-dense last dim.
    x2 = x.reshape(B * C, HW)

    # Parameter layouts: row axis (batch-tile x channel) on sublanes, broadcast on lanes.
    dww_r = jnp.tile(dww.reshape(C, KSIZE * KSIZE), (bt, 1))     # (R, 9)
    dwb_r = jnp.tile(dwb.reshape(C, 1), (bt, 1))                 # (R, 1)
    gamma_r = jnp.tile(gamma.reshape(C, 1), (bt, 1))             # (R, 1)
    beta_r = jnp.tile(beta.reshape(C, 1), (bt, 1))               # (R, 1)
    pwb_r = pwb.reshape(O, 1)                                    # (O, 1)

    # Low-rank group aggregation: project rows -> groups (pre-scaled by 1/(cg*HW)),
    # then broadcast group stats back to rows.  Replaces the old dense (R,R) matrix.
    grp = jnp.arange(R, dtype=jnp.int32) // cg                   # row -> group id
    gid = jnp.arange(G, dtype=jnp.int32)
    onehot = (gid[:, None] == grp[None, :]).astype(jnp.float32)  # (G, R)
    pg = onehot / float(cg * HW)                                 # (G, R)
    bg = onehot.T                                                # (R, G)

    kernel = functools.partial(_dwsep_kernel, H=H, W=W, C=C, O=O, BT=bt, LPAD=lpad)

    # Raise scoped VMEM only when the footprint exceeds the 16 MiB default; keep the
    # request under v7x's 64 MiB physical VMEM.
    vmem_limit = None
    if fp > 16 * 1024 * 1024:
        vmem_limit = min(int(fp * 1.25) + (1 << 20), 60 * 1024 * 1024)

    out2 = pl.pallas_call(
        kernel,
        out_shape=jax.ShapeDtypeStruct((B * O, HW), x.dtype),
        grid_spec=pltpu.PrefetchScalarGridSpec(
            num_scalar_prefetch=0,
            grid=(B // bt,),
            in_specs=[
                pl.BlockSpec((R, HW), lambda i: (i, 0)),              # x rows
                pl.BlockSpec((R, KSIZE * KSIZE), lambda i: (0, 0)),   # depthwise weight
                pl.BlockSpec((R, 1), lambda i: (0, 0)),               # depthwise bias
                pl.BlockSpec((R, 1), lambda i: (0, 0)),               # GN gamma
                pl.BlockSpec((R, 1), lambda i: (0, 0)),               # GN beta
                pl.BlockSpec((G, R), lambda i: (0, 0)),               # group project
                pl.BlockSpec((R, G), lambda i: (0, 0)),               # group broadcast-back
                pl.BlockSpec((O, C), lambda i: (0, 0)),               # pointwise weight
                pl.BlockSpec((O, 1), lambda i: (0, 0)),               # pointwise bias
            ],
            out_specs=pl.BlockSpec((bt * O, HW), lambda i: (i, 0)),
            scratch_shapes=[pltpu.VMEM((R, HW + 2 * lpad), jnp.float32)],
        ),
        compiler_params=pltpu.CompilerParams(
            dimension_semantics=("parallel",),
            vmem_limit_bytes=vmem_limit),
    )(x2, dww_r, dwb_r, gamma_r, beta_r, pg, bg, pww, pwb_r)
    return out2.reshape(B, O, H, W)


def reference_forward(x, dww, dwb, gamma, beta, pww, pwb):
    """Pure-JAX reference mirroring the PyTorch module."""
    B, C, H, W = x.shape
    y = jax.lax.conv_general_dilated(
        x, dww.reshape(C, 1, KSIZE, KSIZE),
        window_strides=(1, 1), padding=((1, 1), (1, 1)),
        dimension_numbers=('NCHW', 'OIHW', 'NCHW'),
        feature_group_count=C)
    y = y + dwb[None, :, None, None]
    yg = y.reshape(B, GROUPS, C // GROUPS, H, W)
    mean = yg.mean(axis=(2, 3, 4), keepdims=True)
    var = ((yg - mean) ** 2).mean(axis=(2, 3, 4), keepdims=True)
    yn = ((yg - mean) / jnp.sqrt(var + EPS)).reshape(B, C, H, W)
    yn = yn * gamma[None, :, None, None] + beta[None, :, None, None]
    out = jnp.einsum('oc,bchw->bohw', pww, yn) + pwb[None, :, None, None]
    return out


if __name__ == "__main__":
    B, C, O, H, W = 2, 8, 8, 16, 16   # in_c=8 (divisible by 4 groups), out_c=8

    key = jax.random.PRNGKey(0)
    ks = jax.random.split(key, 7)
    x = jax.random.normal(ks[0], (B, C, H, W), jnp.float32)

    # Shapes match nn.Conv2d(groups=C) / nn.GroupNorm(4, C) / nn.Conv2d(C, O, 1):
    dww = 0.1 * jax.random.normal(ks[1], (C, KSIZE, KSIZE), jnp.float32)   # (C,1,3,3) squeezed
    dwb = 0.05 * jax.random.normal(ks[2], (C,), jnp.float32)
    gamma = 1.0 + 0.1 * jax.random.normal(ks[3], (C,), jnp.float32)
    beta = 0.1 * jax.random.normal(ks[4], (C,), jnp.float32)
    pww = 0.1 * jax.random.normal(ks[5], (O, C), jnp.float32)              # (O,C,1,1) squeezed
    pwb = 0.05 * jax.random.normal(ks[6], (O,), jnp.float32)

    out = depthwise_conv2d_block(x, dww, dwb, gamma, beta, pww, pwb)
    out = jax.block_until_ready(out)

    ref = reference_forward(x, dww, dwb, gamma, beta, pww, pwb)
    assert out.shape == (B, O, H, W)
    assert jnp.allclose(out, ref, atol=1e-4, rtol=1e-4), "mismatch vs reference"

    print("KERNEL_OK")
</pallas_src>

<mosaic_0001>
module attributes {stable_mosaic.version = 11 : i64} {
  func.func @_dwsep_kernel(%arg0: i32, %arg1: memref<16x256xf32, #tpu.memory_space<vmem>>, %arg2: memref<16x9xf32, #tpu.memory_space<vmem>>, %arg3: memref<16x1xf32, #tpu.memory_space<vmem>>, %arg4: memref<16x1xf32, #tpu.memory_space<vmem>>, %arg5: memref<16x1xf32, #tpu.memory_space<vmem>>, %arg6: memref<8x16xf32, #tpu.memory_space<vmem>>, %arg7: memref<16x8xf32, #tpu.memory_space<vmem>>, %arg8: memref<8x8xf32, #tpu.memory_space<vmem>>, %arg9: memref<8x1xf32, #tpu.memory_space<vmem>>, %arg10: memref<16x256xf32, #tpu.memory_space<vmem>>, %arg11: memref<16x512xf32, #tpu.memory_space<vmem>>) attributes {dimension_semantics = [#tpu.dimension_semantics<parallel>], iteration_bounds = array<i64: 1>, scalar_prefetch = 0 : i64, scratch_operands = 1 : i64, tpu.core_type = #tpu.core_type<tc>, window_params = [{transform_indices = @transform_0, window_bounds = array<i64: 16, 256>}, {pipeline_mode = #tpu.pipeline_mode<synchronous>, transform_indices = @transform_1, window_bounds = array<i64: 16, 9>}, {pipeline_mode = #tpu.pipeline_mode<synchronous>, transform_indices = @transform_2, window_bounds = array<i64: 16, 1>}, {pipeline_mode = #tpu.pipeline_mode<synchronous>, transform_indices = @transform_3, window_bounds = array<i64: 16, 1>}, {pipeline_mode = #tpu.pipeline_mode<synchronous>, transform_indices = @transform_4, window_bounds = array<i64: 16, 1>}, {pipeline_mode = #tpu.pipeline_mode<synchronous>, transform_indices = @transform_5, window_bounds = array<i64: 8, 16>}, {pipeline_mode = #tpu.pipeline_mode<synchronous>, transform_indices = @transform_6, window_bounds = array<i64: 16, 8>}, {pipeline_mode = #tpu.pipeline_mode<synchronous>, transform_indices = @transform_7, window_bounds = array<i64: 8, 8>}, {pipeline_mode = #tpu.pipeline_mode<synchronous>, transform_indices = @transform_8, window_bounds = array<i64: 8, 1>}, {transform_indices = @transform_9, window_bounds = array<i64: 16, 256>}]} {
    %cst = arith.constant 0.000000e+00 : f32
    %0 = vector.broadcast %cst : f32 to vector<16x17xf32>
    %c0 = arith.constant 0 : index
    %c111 = arith.constant 111 : index
    %1 = vector.load %arg11[%c0, %c111] : memref<16x512xf32, #tpu.memory_space<vmem>>, vector<16x17xf32>
    tpu.vector_store %arg11[%c0, %c111], %0 {strides = array<i32>} : memref<16x512xf32, #tpu.memory_space<vmem>>, vector<16x17xf32>,
    %cst_0 = arith.constant 0.000000e+00 : f32
    %2 = vector.broadcast %cst_0 : f32 to vector<16x17xf32>
    %c0_1 = arith.constant 0 : index
    %c384 = arith.constant 384 : index
    %3 = vector.load %arg11[%c0_1, %c384] : memref<16x512xf32, #tpu.memory_space<vmem>>, vector<16x17xf32>
    tpu.vector_store %arg11[%c0_1, %c384], %2 {strides = array<i32>} : memref<16x512xf32, #tpu.memory_space<vmem>>, vector<16x17xf32>,
    %c0_2 = arith.constant 0 : index
    %c0_3 = arith.constant 0 : index
    %4 = vector.load %arg1[%c0_2, %c0_3] : memref<16x256xf32, #tpu.memory_space<vmem>>, vector<16x256xf32>
    %c0_4 = arith.constant 0 : index
    %c128 = arith.constant 128 : index
    %5 = vector.load %arg11[%c0_4, %c128] : memref<16x512xf32, #tpu.memory_space<vmem>>, vector<16x256xf32>
    tpu.vector_store %arg11[%c0_4, %c128], %4 {strides = array<i32>} : memref<16x512xf32, #tpu.memory_space<vmem>>, vector<16x256xf32>,
    %6 = tpu.iota {dimensions = array<i32: 1>} : vector<1x256xi32>
    %c15_i32 = arith.constant 15 : i32
    %7 = vector.broadcast %c15_i32 : i32 to vector<1x256xi32>
    %8 = arith.andi %6, %7 : vector<1x256xi32>
    %c1_i32 = arith.constant 1 : i32
    %9 = vector.broadcast %c1_i32 : i32 to vector<1x256xi32>
    %10 = arith.cmpi sge, %8, %9 : vector<1x256xi32>
    %c14_i32 = arith.constant 14 : i32
    %11 = vector.broadcast %c14_i32 : i32 to vector<1x256xi32>
    %12 = arith.cmpi sle, %8, %11 : vector<1x256xi32>
    %c0_5 = arith.constant 0 : index
    %c0_6 = arith.constant 0 : index
    %13 = vector.load %arg2[%c0_5, %c0_6] : memref<16x9xf32, #tpu.memory_space<vmem>>, vector<16x9xf32>
    %cst_7 = arith.constant 0.000000e+00 : f32
    %14 = vector.broadcast %cst_7 : f32 to vector<16x256xf32>
    %cst_8 = arith.constant 0.000000e+00 : f32
    %15 = vector.broadcast %cst_8 : f32 to vector<16x256xf32>
    %cst_9 = arith.constant 0.000000e+00 : f32
    %16 = vector.broadcast %cst_9 : f32 to vector<16x256xf32>
    %c0_10 = arith.constant 0 : index
    %c111_11 = arith.constant 111 : index
    %17 = vector.load %arg11[%c0_10, %c111_11] : memref<16x512xf32, #tpu.memory_space<vmem>>, vector<16x256xf32>
    %18 = vector.extract_strided_slice %13 {offsets = [0, 0], sizes = [16, 1], strides = [1, 1]} : vector<16x9xf32> to vector<16x1xf32>
    %19 = vector.broadcast %18 : vector<16x1xf32> to vector<16x256xf32>
    %20 = arith.mulf %17, %19 : vector<16x256xf32>
    %21 = arith.addf %14, %20 : vector<16x256xf32>
    %c0_12 = arith.constant 0 : index
    %c112 = arith.constant 112 : index
    %22 = vector.load %arg11[%c0_12, %c112] : memref<16x512xf32, #tpu.memory_space<vmem>>, vector<16x256xf32>
    %23 = vector.extract_strided_slice %13 {offsets = [0, 1], sizes = [16, 1], strides = [1, 1]} : vector<16x9xf32> to vector<16x1xf32>
    %24 = vector.broadcast %23 : vector<16x1xf32> to vector<16x256xf32>
    %25 = arith.mulf %22, %24 : vector<16x256xf32>
    %26 = arith.addf %15, %25 : vector<16x256xf32>
    %c0_13 = arith.constant 0 : index
    %c113 = arith.constant 113 : index
    %27 = vector.load %arg11[%c0_13, %c113] : memref<16x512xf32, #tpu.memory_space<vmem>>, vector<16x256xf32>
    %28 = vector.extract_strided_slice %13 {offsets = [0, 2], sizes = [16, 1], strides = [1, 1]} : vector<16x9xf32> to vector<16x1xf32>
    %29 = vector.broadcast %28 : vector<16x1xf32> to vector<16x256xf32>
    %30 = arith.mulf %27, %29 : vector<16x256xf32>
    %31 = arith.addf %16, %30 : vector<16x256xf32>
    %c0_14 = arith.constant 0 : index
    %c127 = arith.constant 127 : index
    %32 = vector.load %arg11[%c0_14, %c127] : memref<16x512xf32, #tpu.memory_space<vmem>>, vector<16x256xf32>
    %33 = vector.extract_strided_slice %13 {offsets = [0, 3], sizes = [16, 1], strides = [1, 1]} : vector<16x9xf32> to vector<16x1xf32>
    %34 = vector.broadcast %33 : vector<16x1xf32> to vector<16x256xf32>
    %35 = arith.mulf %32, %34 : vector<16x256xf32>
    %36 = arith.addf %21, %35 : vector<16x256xf32>
    %c0_15 = arith.constant 0 : index
    %c128_16 = arith.constant 128 : index
    %37 = vector.load %arg11[%c0_15, %c128_16] : memref<16x512xf32, #tpu.memory_space<vmem>>, vector<16x256xf32>
    %38 = vector.extract_strided_slice %13 {offsets = [0, 4], sizes = [16, 1], strides = [1, 1]} : vector<16x9xf32> to vector<16x1xf32>
    %39 = vector.broadcast %38 : vector<16x1xf32> to vector<16x256xf32>
    %40 = arith.mulf %37, %39 : vector<16x256xf32>
    %41 = arith.addf %26, %40 : vector<16x256xf32>
    %c0_17 = arith.constant 0 : index
    %c129 = arith.constant 129 : index
    %42 = vector.load %arg11[%c0_17, %c129] : memref<16x512xf32, #tpu.memory_space<vmem>>, vector<16x256xf32>
    %43 = vector.extract_strided_slice %13 {offsets = [0, 5], sizes = [16, 1], strides = [1, 1]} : vector<16x9xf32> to vector<16x1xf32>
    %44 = vector.broadcast %43 : vector<16x1xf32> to vector<16x256xf32>
    %45 = arith.mulf %42, %44 : vector<16x256xf32>
    %46 = arith.addf %31, %45 : vector<16x256xf32>
    %c0_18 = arith.constant 0 : index
    %c143 = arith.constant 143 : index
    %47 = vector.load %arg11[%c0_18, %c143] : memref<16x512xf32, #tpu.memory_space<vmem>>, vector<16x256xf32>
    %48 = vector.extract_strided_slice %13 {offsets = [0, 6], sizes = [16, 1], strides = [1, 1]} : vector<16x9xf32> to vector<16x1xf32>
    %49 = vector.broadcast %48 : vector<16x1xf32> to vector<16x256xf32>
    %50 = arith.mulf %47, %49 : vector<16x256xf32>
    %51 = arith.addf %36, %50 : vector<16x256xf32>
    %c0_19 = arith.constant 0 : index
    %c144 = arith.constant 144 : index
    %52 = vector.load %arg11[%c0_19, %c144] : memref<16x512xf32, #tpu.memory_space<vmem>>, vector<16x256xf32>
    %53 = vector.extract_strided_slice %13 {offsets = [0, 7], sizes = [16, 1], strides = [1, 1]} : vector<16x9xf32> to vector<16x1xf32>
    %54 = vector.broadcast %53 : vector<16x1xf32> to vector<16x256xf32>
    %55 = arith.mulf %52, %54 : vector<16x256xf32>
    %56 = arith.addf %41, %55 : vector<16x256xf32>
    %c0_20 = arith.constant 0 : index
    %c145 = arith.constant 145 : index
    %57 = vector.load %arg11[%c0_20, %c145] : memref<16x512xf32, #tpu.memory_space<vmem>>, vector<16x256xf32>
    %58 = vector.extract_strided_slice %13 {offsets = [0, 8], sizes = [16, 1], strides = [1, 1]} : vector<16x9xf32> to vector<16x1xf32>
    %59 = vector.broadcast %58 : vector<16x1xf32> to vector<16x256xf32>
    %60 = arith.mulf %57, %59 : vector<16x256xf32>
    %61 = arith.addf %46, %60 : vector<16x256xf32>
    %cst_21 = arith.constant 0.000000e+00 : f32
    %62 = vector.shape_cast %10 : vector<1x256xi1> to vector<1x256xi1>
    %63 = vector.broadcast %62 : vector<1x256xi1> to vector<16x256xi1>
    %64 = vector.broadcast %cst_21 : f32 to vector<16x256xf32>
    %65 = arith.select %63, %51, %64 : vector<16x256xi1>, vector<16x256xf32>
    %66 = arith.addf %56, %65 : vector<16x256xf32>
    %cst_22 = arith.constant 0.000000e+00 : f32
    %67 = vector.shape_cast %12 : vector<1x256xi1> to vector<1x256xi1>
    %68 = vector.broadcast %67 : vector<1x256xi1> to vector<16x256xi1>
    %69 = vector.broadcast %cst_22 : f32 to vector<16x256xf32>
    %70 = arith.select %68, %61, %69 : vector<16x256xi1>, vector<16x256xf32>
    %71 = arith.addf %66, %70 : vector<16x256xf32>
    %c0_23 = arith.constant 0 : index
    %c0_24 = arith.constant 0 : index
    %72 = vector.load %arg3[%c0_23, %c0_24] : memref<16x1xf32, #tpu.memory_space<vmem>>, vector<16x1xf32>
    %73 = vector.broadcast %72 : vector<16x1xf32> to vector<16x256xf32>
    %74 = arith.addf %71, %73 : vector<16x256xf32>
    %cst_25 = arith.constant dense<0.000000e+00> : vector<16xf32>
    %75 = vector.multi_reduction <add>, %74, %cst_25 [1] : vector<16x256xf32> to vector<16xf32>
    %76 = vector.shape_cast %75 : vector<16xf32> to vector<16x1xf32>
    %77 = arith.mulf %74, %74 : vector<16x256xf32>
    %cst_26 = arith.constant dense<0.000000e+00> : vector<16xf32>
    %78 = vector.multi_reduction <add>, %77, %cst_26 [1] : vector<16x256xf32> to vector<16xf32>
    %79 = vector.shape_cast %78 : vector<16xf32> to vector<16x1xf32>
    %80 = tpu.iota {dimensions = array<i32: 1>} : vector<1x2xi32>
    %c0_i32 = arith.constant 0 : i32
    %81 = vector.broadcast %c0_i32 : i32 to vector<1x2xi32>
    %82 = arith.cmpi eq, %80, %81 : vector<1x2xi32>
    %83 = vector.shape_cast %82 : vector<1x2xi1> to vector<1x2xi1>
    %84 = vector.broadcast %83 : vector<1x2xi1> to vector<16x2xi1>
    %85 = vector.shape_cast %76 : vector<16x1xf32> to vector<16x1xf32>
    %86 = vector.broadcast %85 : vector<16x1xf32> to vector<16x2xf32>
    %87 = vector.shape_cast %79 : vector<16x1xf32> to vector<16x1xf32>
    %88 = vector.broadcast %87 : vector<16x1xf32> to vector<16x2xf32>
    %89 = arith.select %84, %86, %88 : vector<16x2xi1>, vector<16x2xf32>
    %c0_27 = arith.constant 0 : index
    %c0_28 = arith.constant 0 : index
    %90 = vector.load %arg6[%c0_27, %c0_28] : memref<8x16xf32, #tpu.memory_space<vmem>>, vector<8x16xf32>
    %c0_29 = arith.constant 0 : index
    %c0_30 = arith.constant 0 : index
    %91 = vector.load %arg7[%c0_29, %c0_30] : memref<16x8xf32, #tpu.memory_space<vmem>>, vector<16x8xf32>
    %cst_31 = arith.constant dense<0.000000e+00> : vector<8x2xf32>
    %92 = tpu.matmul %90, %89, %cst_31 {dimension_numbers = #tpu.dot_dimension_numbers<[1], [0], [0], [1], [0, 0, 1, 1], [], []>} : vector<8x16xf32>, vector<16x2xf32>, vector<8x2xf32> -> vector<8x2xf32>
    %cst_32 = arith.constant dense<0.000000e+00> : vector<16x2xf32>
    %93 = tpu.matmul %91, %92, %cst_32 {dimension_numbers = #tpu.dot_dimension_numbers<[1], [0], [0], [1], [0, 0, 1, 1], [], []>} : vector<16x8xf32>, vector<8x2xf32>, vector<16x2xf32> -> vector<16x2xf32>
    %94 = vector.extract_strided_slice %93 {offsets = [0, 0], sizes = [16, 1], strides = [1, 1]} : vector<16x2xf32> to vector<16x1xf32>
    %95 = vector.extract_strided_slice %93 {offsets = [0, 1], sizes = [16, 1], strides = [1, 1]} : vector<16x2xf32> to vector<16x1xf32>
    %96 = arith.mulf %94, %94 : vector<16x1xf32>
    %97 = arith.subf %95, %96 : vector<16x1xf32>
    %cst_33 = arith.constant 9.99999974E-6 : f32
    %98 = vector.broadcast %cst_33 : f32 to vector<16x1xf32>
    %99 = arith.addf %97, %98 : vector<16x1xf32>
    %100 = math.rsqrt %99 : vector<16x1xf32>
    %c0_34 = arith.constant 0 : index
    %c0_35 = arith.constant 0 : index
    %101 = vector.load %arg4[%c0_34, %c0_35] : memref<16x1xf32, #tpu.memory_space<vmem>>, vector<16x1xf32>
    %c0_36 = arith.constant 0 : index
    %c0_37 = arith.constant 0 : index
    %102 = vector.load %arg5[%c0_36, %c0_37] : memref<16x1xf32, #tpu.memory_space<vmem>>, vector<16x1xf32>
    %103 = vector.broadcast %94 : vector<16x1xf32> to vector<16x256xf32>
    %104 = arith.subf %74, %103 : vector<16x256xf32>
    %105 = arith.mulf %100, %101 : vector<16x1xf32>
    %106 = vector.broadcast %105 : vector<16x1xf32> to vector<16x256xf32>
    %107 = arith.mulf %104, %106 : vector<16x256xf32>
    %108 = vector.broadcast %102 : vector<16x1xf32> to vector<16x256xf32>
    %109 = arith.addf %107, %108 : vector<16x256xf32>
    %c0_38 = arith.constant 0 : index
    %c0_39 = arith.constant 0 : index
    %110 = vector.load %arg8[%c0_38, %c0_39] : memref<8x8xf32, #tpu.memory_space<vmem>>, vector<8x8xf32>
    %c0_40 = arith.constant 0 : index
    %c0_41 = arith.constant 0 : index
    %111 = vector.load %arg9[%c0_40, %c0_41] : memref<8x1xf32, #tpu.memory_space<vmem>>, vector<8x1xf32>
    %112 = vector.extract_strided_slice %109 {offsets = [0, 0], sizes = [8, 256], strides = [1, 1]} : vector<16x256xf32> to vector<8x256xf32>
    %cst_42 = arith.constant dense<0.000000e+00> : vector<8x256xf32>
    %113 = tpu.matmul %110, %112, %cst_42 {dimension_numbers = #tpu.dot_dimension_numbers<[1], [0], [0], [1], [0, 0, 1, 1], [], []>} : vector<8x8xf32>, vector<8x256xf32>, vector<8x256xf32> -> vector<8x256xf32>
    %114 = vector.broadcast %111 : vector<8x1xf32> to vector<8x256xf32>
    %115 = arith.addf %113, %114 : vector<8x256xf32>
    %c0_43 = arith.constant 0 : index
    %c0_44 = arith.constant 0 : index
    %116 = vector.load %arg10[%c0_43, %c0_44] : memref<16x256xf32, #tpu.memory_space<vmem>>, vector<8x256xf32>
    tpu.vector_store %arg10[%c0_43, %c0_44], %115 {strides = array<i32>} : memref<16x256xf32, #tpu.memory_space<vmem>>, vector<8x256xf32>,
    %117 = vector.extract_strided_slice %109 {offsets = [8, 0], sizes = [8, 256], strides = [1, 1]} : vector<16x256xf32> to vector<8x256xf32>
    %cst_45 = arith.constant dense<0.000000e+00> : vector<8x256xf32>
    %118 = tpu.matmul %110, %117, %cst_45 {dimension_numbers = #tpu.dot_dimension_numbers<[1], [0], [0], [1], [0, 0, 1, 1], [], []>} : vector<8x8xf32>, vector<8x256xf32>, vector<8x256xf32> -> vector<8x256xf32>
    %119 = vector.broadcast %111 : vector<8x1xf32> to vector<8x256xf32>
    %120 = arith.addf %118, %119 : vector<8x256xf32>
    %c8 = arith.constant 8 : index
    %c0_46 = arith.constant 0 : index
    %121 = vector.load %arg10[%c8, %c0_46] : memref<16x256xf32, #tpu.memory_space<vmem>>, vector<8x256xf32>
    tpu.vector_store %arg10[%c8, %c0_46], %120 {strides = array<i32>} : memref<16x256xf32, #tpu.memory_space<vmem>>, vector<8x256xf32>,
    return
  }
  func.func @transform_0(%arg0: i32) -> (i32, i32) {
    %c0_i32 = arith.constant 0 : i32
    %c0_i32_0 = arith.constant 0 : i32
    return %arg0, %c0_i32 : i32, i32
  }
  func.func @transform_1(%arg0: i32) -> (i32, i32) {
    %c0_i32 = arith.constant 0 : i32
    %c0_i32_0 = arith.constant 0 : i32
    %c0_i32_1 = arith.constant 0 : i32
    return %c0_i32, %c0_i32_0 : i32, i32
  }
  func.func @transform_2(%arg0: i32) -> (i32, i32) {
    %c0_i32 = arith.constant 0 : i32
    %c0_i32_0 = arith.constant 0 : i32
    %c0_i32_1 = arith.constant 0 : i32
    return %c0_i32, %c0_i32_0 : i32, i32
  }
  func.func @transform_3(%arg0: i32) -> (i32, i32) {
    %c0_i32 = arith.constant 0 : i32
    %c0_i32_0 = arith.constant 0 : i32
    %c0_i32_1 = arith.constant 0 : i32
    return %c0_i32, %c0_i32_0 : i32, i32
  }
  func.func @transform_4(%arg0: i32) -> (i32, i32) {
    %c0_i32 = arith.constant 0 : i32
    %c0_i32_0 = arith.constant 0 : i32
    %c0_i32_1 = arith.constant 0 : i32
    return %c0_i32, %c0_i32_0 : i32, i32
  }
  func.func @transform_5(%arg0: i32) -> (i32, i32) {
    %c0_i32 = arith.constant 0 : i32
    %c0_i32_0 = arith.constant 0 : i32
    %c0_i32_1 = arith.constant 0 : i32
    return %c0_i32, %c0_i32_0 : i32, i32
  }
  func.func @transform_6(%arg0: i32) -> (i32, i32) {
    %c0_i32 = arith.constant 0 : i32
    %c0_i32_0 = arith.constant 0 : i32
    %c0_i32_1 = arith.constant 0 : i32
    return %c0_i32, %c0_i32_0 : i32, i32
  }
  func.func @transform_7(%arg0: i32) -> (i32, i32) {
    %c0_i32 = arith.constant 0 : i32
    %c0_i32_0 = arith.constant 0 : i32
    %c0_i32_1 = arith.constant 0 : i32
    return %c0_i32, %c0_i32_0 : i32, i32
  }
  func.func @transform_8(%arg0: i32) -> (i32, i32) {
    %c0_i32 = arith.constant 0 : i32
    %c0_i32_0 = arith.constant 0 : i32
    %c0_i32_1 = arith.constant 0 : i32
    return %c0_i32, %c0_i32_0 : i32, i32
  }
  func.func @transform_9(%arg0: i32) -> (i32, i32) {
    %c0_i32 = arith.constant 0 : i32
    %c0_i32_0 = arith.constant 0 : i32
    return %arg0, %c0_i32 : i32, i32
  }
}

</mosaic_0001>

<llo_original>
// kernel: tpu_custom_call.1
$region0: #{tpu_custom_call.1}
  #allocation0 [shape = 'u32[]', space=smem, size = 0x4, offset = 0x4, fixed_abs, tag = 'smem constant byte address 0x4 - core index']
  #allocation1 [shape = 'u32[72,128]{1,0:T(1,128)}', space=vmem, size = 0x9000, scoped, tag = 'internal scratch']
  #allocation2 [shape = 'f32[16,512]{1,0:T(8,128)}', space=vmem, size = 0x8000, scoped, tag = 'scratch operand']
  %s0 = inlined_call_operand.vmem [shape: f32[16,256], index: 0, kind: input, shape index: {}]
  %s1 = inlined_call_operand.vmem [shape: f32[16,9], index: 1, kind: input, shape index: {}]
  %s2 = inlined_call_operand.vmem [shape: f32[16,1], index: 2, kind: input, shape index: {}]
  %s3 = inlined_call_operand.vmem [shape: f32[16,1], index: 3, kind: input, shape index: {}]
  %s4 = inlined_call_operand.vmem [shape: f32[16,1], index: 4, kind: input, shape index: {}]
  %s5 = inlined_call_operand.vmem [shape: f32[8,16], index: 5, kind: input, shape index: {}]
  %s6 = inlined_call_operand.vmem [shape: f32[16,8], index: 6, kind: input, shape index: {}]
  %s7 = inlined_call_operand.vmem [shape: f32[8,8], index: 7, kind: input, shape index: {}]
  %s8 = inlined_call_operand.vmem [shape: f32[8,1], index: 8, kind: input, shape index: {}]
  %s9 = inlined_call_operand.hbm [shape: f32[16,256], index: 9, kind: output, shape index: {}]
  %s10 = sld [smem:[#allocation0]]
  $region46: #{tpu_custom_call.1} parent=0
    _
  %s12 = ssub.s32 1, %s10
  %s13 = scalar_select 0, %s12, %s10
  $region1: #{tpu_custom_call.1} parent=0
    #allocation3 [shape = 'u8[16384]{0}', space=vmem, size = 0x4000, scoped, tag = 'output window, operand 0, single buffered']
    #allocation4 [shape = 's32[1]{0}', space=sflag, size = 0x4, scoped, tag = 'scoped memory for tpu_custom_call.1']
    %14 = vsyncpa [#allocation4], 0
    // Predicated region
    $region2: #{tpu_custom_call.1} parent=1 // pred_check
      _
    $region3: #{tpu_custom_call.1} parent=1 // pred_check_branch
      %16 = sbr.rel (0) target = $region5
    $region4: #{tpu_custom_call.1} parent=1 // pred_region
      _
    $region5: #{tpu_custom_call.1} parent=1 // pred_fallthru
      _
    // Predicated region
    $region6: #{tpu_custom_call.1} parent=1 // pred_check
      _
    $region7: #{tpu_custom_call.1} parent=1 // pred_check_branch
      %18 = sbr.rel (0) target = $region9
    $region8: #{tpu_custom_call.1} parent=1 // pred_region
      _
    $region9: #{tpu_custom_call.1} parent=1 // pred_fallthru
      _
    // Predicated region
    $region10: #{tpu_custom_call.1} parent=1 // pred_check
      _
    $region11: #{tpu_custom_call.1} parent=1 // pred_check_branch
      %20 = sbr.rel (0) target = $region13
    $region12: #{tpu_custom_call.1} parent=1 // pred_region
      _
    $region13: #{tpu_custom_call.1} parent=1 // pred_fallthru
      _
    // Predicated region
    $region14: #{tpu_custom_call.1} parent=1 // pred_check
      _
    $region15: #{tpu_custom_call.1} parent=1 // pred_check_branch
      %22 = sbr.rel (0) target = $region17
    $region16: #{tpu_custom_call.1} parent=1 // pred_region
      _
    $region17: #{tpu_custom_call.1} parent=1 // pred_fallthru
      _
    // Predicated region
    $region18: #{tpu_custom_call.1} parent=1 // pred_check
      _
    $region19: #{tpu_custom_call.1} parent=1 // pred_check_branch
      %24 = sbr.rel (0) target = $region21
    $region20: #{tpu_custom_call.1} parent=1 // pred_region
      _
    $region21: #{tpu_custom_call.1} parent=1 // pred_fallthru
      _
    // Predicated region
    $region22: #{tpu_custom_call.1} parent=1 // pred_check
      _
    $region23: #{tpu_custom_call.1} parent=1 // pred_check_branch
      %26 = sbr.rel (0) target = $region25
    $region24: #{tpu_custom_call.1} parent=1 // pred_region
      _
    $region25: #{tpu_custom_call.1} parent=1 // pred_fallthru
      _
    // Predicated region
    $region26: #{tpu_custom_call.1} parent=1 // pred_check
      _
    $region27: #{tpu_custom_call.1} parent=1 // pred_check_branch
      %28 = sbr.rel (0) target = $region29
    $region28: #{tpu_custom_call.1} parent=1 // pred_region
      _
    $region29: #{tpu_custom_call.1} parent=1 // pred_fallthru
      _
    // Predicated region
    $region30: #{tpu_custom_call.1} parent=1 // pred_check
      _
    $region31: #{tpu_custom_call.1} parent=1 // pred_check_branch
      %30 = sbr.rel (0) target = $region33
    $region32: #{tpu_custom_call.1} parent=1 // pred_region
      _
    $region33: #{tpu_custom_call.1} parent=1 // pred_fallthru
      _
    // Predicated region
    $region34: #{tpu_custom_call.1} parent=1 // pred_check
      _
    $region35: #{tpu_custom_call.1} parent=1 // pred_check_branch
      %32 = sbr.rel (0) target = $region37
    $region36: #{tpu_custom_call.1} parent=1 // pred_region
      _
    $region37: #{tpu_custom_call.1} parent=1 // pred_fallthru
      _
    %vm33 = vcmask 1048440
    %34 = vst.msk [vmem:[#allocation2] sm:$0xff] %vm33, 0.0
    %35 = vst.msk [vmem:[#allocation2 + $0x20] sm:$0xff] %vm33, 0.0
    %vm36 = vcmask 138240
    %37 = vst.msk [vmem:[#allocation2 + $0x18] sm:$0xff] %vm36, 0.0
    %38 = vst.msk [vmem:[#allocation2 + $0x38] sm:$0xff] %vm36, 0.0
    %v39 = vld [vmem:[%s0] sm:$0xff]
    %v40 = vld [vmem:[%s0 + $0x8] sm:$0xff]
    %v41 = vld [vmem:[%s0 + $0x10] sm:$0xff]
    %v42 = vld [vmem:[%s0 + $0x18] sm:$0xff]
    %43 = vst [vmem:[#allocation2 + $0x8] sm:$0xff] %v39
    %44 = vst [vmem:[#allocation2 + $0x10] sm:$0xff] %v40
    %45 = vst [vmem:[#allocation2 + $0x28] sm:$0xff] %v41
    %46 = vst [vmem:[#allocation2 + $0x30] sm:$0xff] %v42
    %v47 = vlaneseq
    %v48 = vand.u32 %v47, 127
    %v49 = vadd.s32 %v48, 128
    %v50 = vand.u32 %v48, 15
    %v51 = vand.u32 %v49, 15
    %vm52 = vcmp.ge.s32.totalorder %v50, 1
    %vm53 = vcmp.ge.s32.totalorder %v51, 1
    %vm54 = vcmp.le.s32.totalorder %v50, 14
    %vm55 = vcmp.le.s32.totalorder %v51, 14
    %v56 = vld [vmem:[%s1] sm:$0xff]
    %v57 = vld [vmem:[%s1 + $0x8] sm:$0xff]
    %v58 = vld [vmem:[#allocation2] sm:$0xff]
    %v59 = vld [vmem:[#allocation2 + $0x8] sm:$0xff]
    %v60 = vld [vmem:[#allocation2 + $0x10] sm:$0xff]
    %v61 = vld [vmem:[#allocation2 + $0x20] sm:$0xff]
    %v62 = vld [vmem:[#allocation2 + $0x28] sm:$0xff]
    %v63 = vld [vmem:[#allocation2 + $0x30] sm:$0xff]
    %65 = vset.pattern.permute.xlu0 0
    %66 = vperm.xlu0 %65, %v56
    %v67 = vpop.permute.xlu0 %66
    %70 = vset.pattern.permute.xlu0 0
    %71 = vperm.xlu0 %70, %v57
    %v72 = vpop.permute.xlu0 %71
    %v74 = vmul.f32 %v58, %v67
    %v75 = vmul.f32 %v59, %v67
    %v76 = vmul.f32 %v60, %v67
    %v77 = vmul.f32 %v61, %v72
    %v78 = vmul.f32 %v62, %v72
    %v79 = vmul.f32 %v63, %v72
    %v80 = vadd.f32 %v74, 0.0
    %v81 = vadd.f32 %v75, 0.0
    %v82 = vadd.f32 %v76, 0.0
    %v83 = vadd.f32 %v77, 0.0
    %v84 = vadd.f32 %v78, 0.0
    %v85 = vadd.f32 %v79, 0.0
    %86 = vset.pattern.permute.xlu0 1
    %87 = vperm.xlu0 %86, %v56
    %v88 = vpop.permute.xlu0 %87
    %90 = vset.pattern.permute.xlu0 1
    %91 = vperm.xlu0 %90, %v57
    %v92 = vpop.permute.xlu0 %91
    %v94 = vmul.f32 %v58, %v88
    %v95 = vmul.f32 %v59, %v88
    %v96 = vmul.f32 %v60, %v88
    %v97 = vmul.f32 %v61, %v92
    %v98 = vmul.f32 %v62, %v92
    %v99 = vmul.f32 %v63, %v92
    %v100 = vadd.f32 %v94, 0.0
    %v101 = vadd.f32 %v95, 0.0
    %v102 = vadd.f32 %v96, 0.0
    %v103 = vadd.f32 %v97, 0.0
    %v104 = vadd.f32 %v98, 0.0
    %v105 = vadd.f32 %v99, 0.0
    %106 = vset.pattern.permute.xlu0 2
    %107 = vperm.xlu0 %106, %v56
    %v108 = vpop.permute.xlu0 %107
    %110 = vset.pattern.permute.xlu0 2
    %111 = vperm.xlu0 %110, %v57
    %v112 = vpop.permute.xlu0 %111
    %v114 = vmul.f32 %v58, %v108
    %v115 = vmul.f32 %v59, %v108
    %v116 = vmul.f32 %v60, %v108
    %v117 = vmul.f32 %v61, %v112
    %v118 = vmul.f32 %v62, %v112
    %v119 = vmul.f32 %v63, %v112
    %v120 = vadd.f32 %v114, 0.0
    %v121 = vadd.f32 %v115, 0.0
    %v122 = vadd.f32 %v116, 0.0
    %v123 = vadd.f32 %v117, 0.0
    %v124 = vadd.f32 %v118, 0.0
    %v125 = vadd.f32 %v119, 0.0
    %126 = vset.pattern.permute.xlu0 3
    %127 = vperm.xlu0 %126, %v56
    %v128 = vpop.permute.xlu0 %127
    %130 = vset.pattern.permute.xlu0 3
    %131 = vperm.xlu0 %130, %v57
    %v132 = vpop.permute.xlu0 %131
    %v134 = vmul.f32 %v58, %v128
    %v135 = vmul.f32 %v59, %v128
    %v136 = vmul.f32 %v60, %v128
    %v137 = vmul.f32 %v61, %v132
    %v138 = vmul.f32 %v62, %v132
    %v139 = vmul.f32 %v63, %v132
    %146 = vrot.lane.b32.xlu0 %v134, 112
    %v147 = vpop.permute.xlu0 %146
    %148 = vrot.lane.b32.xlu0 %v135, 112
    %v149 = vpop.permute.xlu0 %148
    %150 = vrot.lane.b32.xlu0 %v136, 112
    %v151 = vpop.permute.xlu0 %150
    %152 = vrot.lane.b32.xlu0 %v137, 112
    %v153 = vpop.permute.xlu0 %152
    %154 = vrot.lane.b32.xlu0 %v138, 112
    %v155 = vpop.permute.xlu0 %154
    %156 = vrot.lane.b32.xlu0 %v139, 112
    %v157 = vpop.permute.xlu0 %156
    %vm158 = vcmask 916480
    %v159 = vsel %vm158, %v147, %v149
    %v160 = vsel %vm158, %v149, %v151
    %v161 = vsel %vm158, %v153, %v155
    %v162 = vsel %vm158, %v155, %v157
    %v169 = vadd.f32 %v80, %v159
    %v170 = vadd.f32 %v81, %v160
    %v171 = vadd.f32 %v82, %v151
    %v172 = vadd.f32 %v83, %v161
    %v173 = vadd.f32 %v84, %v162
    %v174 = vadd.f32 %v85, %v157
    %175 = vset.pattern.permute.xlu0 4
    %176 = vperm.xlu0 %175, %v56
    %v177 = vpop.permute.xlu0 %176
    %179 = vset.pattern.permute.xlu0 4
    %180 = vperm.xlu0 %179, %v57
    %v181 = vpop.permute.xlu0 %180
    %v183 = vmul.f32 %v59, %v177
    %v184 = vmul.f32 %v60, %v177
    %v185 = vmul.f32 %v62, %v181
    %v186 = vmul.f32 %v63, %v181
    %191 = vrot.lane.b32.xlu0 %v183, 112
    %v192 = vpop.permute.xlu0 %191
    %193 = vrot.lane.b32.xlu0 %v184, 112
    %v194 = vpop.permute.xlu0 %193
    %195 = vrot.lane.b32.xlu0 %v185, 112
    %v196 = vpop.permute.xlu0 %195
    %197 = vrot.lane.b32.xlu0 %v186, 112
    %v198 = vpop.permute.xlu0 %197
    %v199 = vsel %vm158, %v192, %v194
    %v200 = vsel %vm158, %v196, %v198
    %v207 = vadd.f32 %v100, %v192
    %v208 = vadd.f32 %v101, %v199
    %v209 = vadd.f32 %v102, %v194
    %v210 = vadd.f32 %v103, %v196
    %v211 = vadd.f32 %v104, %v200
    %v212 = vadd.f32 %v105, %v198
    %v213 = vld [vmem:[#allocation2 + $0x8] sm:$0xff]
    %v214 = vld [vmem:[#allocation2 + $0x10] sm:$0xff]
    %v215 = vld [vmem:[#allocation2 + $0x18] sm:$0xff]
    %v216 = vld [vmem:[#allocation2 + $0x28] sm:$0xff]
    %v217 = vld [vmem:[#allocation2 + $0x30] sm:$0xff]
    %v218 = vld [vmem:[#allocation2 + $0x38] sm:$0xff]
    %219 = vset.pattern.permute.xlu0 5
    %220 = vperm.xlu0 %219, %v56
    %v221 = vpop.permute.xlu0 %220
    %223 = vset.pattern.permute.xlu0 5
    %224 = vperm.xlu0 %223, %v57
    %v225 = vpop.permute.xlu0 %224
    %v227 = vmul.f32 %v213, %v221
    %v228 = vmul.f32 %v214, %v221
    %v229 = vmul.f32 %v215, %v221
    %v230 = vmul.f32 %v216, %v225
    %v231 = vmul.f32 %v217, %v225
    %v232 = vmul.f32 %v218, %v225
    %239 = vrot.lane.b32.xlu0 %v227, 112
    %v240 = vpop.permute.xlu0 %239
    %241 = vrot.lane.b32.xlu0 %v228, 112
    %v242 = vpop.permute.xlu0 %241
    %243 = vrot.lane.b32.xlu0 %v229, 112
    %v244 = vpop.permute.xlu0 %243
    %245 = vrot.lane.b32.xlu0 %v230, 112
    %v246 = vpop.permute.xlu0 %245
    %247 = vrot.lane.b32.xlu0 %v231, 112
    %v248 = vpop.permute.xlu0 %247
    %249 = vrot.lane.b32.xlu0 %v232, 112
    %v250 = vpop.permute.xlu0 %249
    %v251 = vsel %vm158, %v240, %v242
    %v252 = vsel %vm158, %v242, %v244
    %v253 = vsel %vm158, %v246, %v248
    %v254 = vsel %vm158, %v248, %v250
    %v261 = vadd.f32 %v120, %v240
    %v262 = vadd.f32 %v121, %v251
    %v263 = vadd.f32 %v122, %v252
    %v264 = vadd.f32 %v123, %v246
    %v265 = vadd.f32 %v124, %v253
    %v266 = vadd.f32 %v125, %v254
    %267 = vset.pattern.permute.xlu0 6
    %268 = vperm.xlu0 %267, %v56
    %v269 = vpop.permute.xlu0 %268
    %271 = vset.pattern.permute.xlu0 6
    %272 = vperm.xlu0 %271, %v57
    %v273 = vpop.permute.xlu0 %272
    %v275 = vmul.f32 %v213, %v269
    %v276 = vmul.f32 %v214, %v269
    %v277 = vmul.f32 %v215, %v269
    %v278 = vmul.f32 %v216, %v273
    %v279 = vmul.f32 %v217, %v273
    %v280 = vmul.f32 %v218, %v273
    %287 = vrot.lane.b32.xlu0 %v275, 96
    %v288 = vpop.permute.xlu0 %287
    %289 = vrot.lane.b32.xlu0 %v276, 96
    %v290 = vpop.permute.xlu0 %289
    %291 = vrot.lane.b32.xlu0 %v277, 96
    %v292 = vpop.permute.xlu0 %291
    %293 = vrot.lane.b32.xlu0 %v278, 96
    %v294 = vpop.permute.xlu0 %293
    %295 = vrot.lane.b32.xlu0 %v279, 96
    %v296 = vpop.permute.xlu0 %295
    %297 = vrot.lane.b32.xlu0 %v280, 96
    %v298 = vpop.permute.xlu0 %297
    %vm299 = vcmask 785408
    %v300 = vsel %vm299, %v288, %v290
    %v301 = vsel %vm299, %v290, %v292
    %v302 = vsel %vm299, %v294, %v296
    %v303 = vsel %vm299, %v296, %v298
    %v310 = vadd.f32 %v169, %v288
    %v311 = vadd.f32 %v170, %v300
    %v312 = vadd.f32 %v171, %v301
    %v313 = vadd.f32 %v172, %v294
    %v314 = vadd.f32 %v173, %v302
    %v315 = vadd.f32 %v174, %v303
    %316 = vset.pattern.permute.xlu0 7
    %317 = vperm.xlu0 %316, %v56
    %v318 = vpop.permute.xlu0 %317
    %320 = vset.pattern.permute.xlu0 7
    %321 = vperm.xlu0 %320, %v57
    %v322 = vpop.permute.xlu0 %321
    %v324 = vmul.f32 %v213, %v318
    %v325 = vmul.f32 %v214, %v318
    %v326 = vmul.f32 %v215, %v318
    %v327 = vmul.f32 %v216, %v322
    %v328 = vmul.f32 %v217, %v322
    %v329 = vmul.f32 %v218, %v322
    %336 = vrot.lane.b32.xlu0 %v324, 96
    %v337 = vpop.permute.xlu0 %336
    %338 = vrot.lane.b32.xlu0 %v325, 96
    %v339 = vpop.permute.xlu0 %338
    %340 = vrot.lane.b32.xlu0 %v326, 96
    %v341 = vpop.permute.xlu0 %340
    %342 = vrot.lane.b32.xlu0 %v327, 96
    %v343 = vpop.permute.xlu0 %342
    %344 = vrot.lane.b32.xlu0 %v328, 96
    %v345 = vpop.permute.xlu0 %344
    %346 = vrot.lane.b32.xlu0 %v329, 96
    %v347 = vpop.permute.xlu0 %346
    %v348 = vsel %vm299, %v337, %v339
    %v349 = vsel %vm299, %v339, %v341
    %v350 = vsel %vm299, %v343, %v345
    %v351 = vsel %vm299, %v345, %v347
    %v358 = vadd.f32 %v207, %v337
    %v359 = vadd.f32 %v208, %v348
    %v360 = vadd.f32 %v209, %v349
    %v361 = vadd.f32 %v210, %v343
    %v362 = vadd.f32 %v211, %v350
    %v363 = vadd.f32 %v212, %v351
    %364 = vset.pattern.permute.xlu0 8
    %365 = vperm.xlu0 %364, %v56
    %v366 = vpop.permute.xlu0 %365
    %368 = vset.pattern.permute.xlu0 8
    %369 = vperm.xlu0 %368, %v57
    %v370 = vpop.permute.xlu0 %369
    %v372 = vmul.f32 %v213, %v366
    %v373 = vmul.f32 %v214, %v366
    %v374 = vmul.f32 %v215, %v366
    %v375 = vmul.f32 %v216, %v370
    %v376 = vmul.f32 %v217, %v370
    %v377 = vmul.f32 %v218, %v370
    %384 = vrot.lane.b32.xlu0 %v372, 96
    %v385 = vpop.permute.xlu0 %384
    %386 = vrot.lane.b32.xlu0 %v373, 96
    %v387 = vpop.permute.xlu0 %386
    %388 = vrot.lane.b32.xlu0 %v374, 96
    %v389 = vpop.permute.xlu0 %388
    %390 = vrot.lane.b32.xlu0 %v375, 96
    %v391 = vpop.permute.xlu0 %390
    %392 = vrot.lane.b32.xlu0 %v376, 96
    %v393 = vpop.permute.xlu0 %392
    %394 = vrot.lane.b32.xlu0 %v377, 96
    %v395 = vpop.permute.xlu0 %394
    %v396 = vsel %vm299, %v385, %v387
    %v397 = vsel %vm299, %v387, %v389
    %v398 = vsel %vm299, %v391, %v393
    %v399 = vsel %vm299, %v393, %v395
    %v406 = vadd.f32 %v261, %v385
    %v407 = vadd.f32 %v262, %v396
    %v408 = vadd.f32 %v263, %v397
    %v409 = vadd.f32 %v264, %v391
    %v410 = vadd.f32 %v265, %v398
    %v411 = vadd.f32 %v266, %v399
    %v412 = vsel %vm52, 1, 0
    %v413 = vsel %vm53, 1, 0
    %vm414 = vcmp.eq.s32.totalorder %v412, 1
    %vm415 = vcmp.eq.s32.totalorder %v413, 1
    %422 = vrot.lane.b32.xlu0 %v310, 17
    %v423 = vpop.permute.xlu0 %422
    %424 = vrot.lane.b32.xlu0 %v311, 17
    %v425 = vpop.permute.xlu0 %424
    %426 = vrot.lane.b32.xlu0 %v312, 17
    %v427 = vpop.permute.xlu0 %426
    %428 = vrot.lane.b32.xlu0 %v313, 17
    %v429 = vpop.permute.xlu0 %428
    %430 = vrot.lane.b32.xlu0 %v314, 17
    %v431 = vpop.permute.xlu0 %430
    %432 = vrot.lane.b32.xlu0 %v315, 17
    %v433 = vpop.permute.xlu0 %432
    %v434 = vsel %vm36, %v423, %v425
    %v435 = vsel %vm36, %v425, %v427
    %v436 = vsel %vm36, %v429, %v431
    %v437 = vsel %vm36, %v431, %v433
    %v442 = vsel %vm414, %v434, 0.0
    %v443 = vsel %vm415, %v435, 0.0
    %v444 = vsel %vm414, %v436, 0.0
    %v445 = vsel %vm415, %v437, 0.0
    %450 = vrot.lane.b32.xlu0 %v442, 112
    %v451 = vpop.permute.xlu0 %450
    %452 = vrot.lane.b32.xlu0 %v443, 112
    %v453 = vpop.permute.xlu0 %452
    %454 = vrot.lane.b32.xlu0 %v444, 112
    %v455 = vpop.permute.xlu0 %454
    %456 = vrot.lane.b32.xlu0 %v445, 112
    %v457 = vpop.permute.xlu0 %456
    %v458 = vsel %vm158, %v451, %v453
    %v459 = vsel %vm158, %v455, %v457
    %v466 = vadd.f32 %v358, %v451
    %v467 = vadd.f32 %v359, %v458
    %v468 = vadd.f32 %v360, %v453
    %v469 = vadd.f32 %v361, %v455
    %v470 = vadd.f32 %v362, %v459
    %v471 = vadd.f32 %v363, %v457
    %v472 = vsel %vm54, 1, 0
    %v473 = vsel %vm55, 1, 0
    %vm474 = vcmp.eq.s32.totalorder %v472, 1
    %vm475 = vcmp.eq.s32.totalorder %v473, 1
    %482 = vrot.lane.b32.xlu0 %v406, 15
    %v483 = vpop.permute.xlu0 %482
    %484 = vrot.lane.b32.xlu0 %v407, 15
    %v485 = vpop.permute.xlu0 %484
    %486 = vrot.lane.b32.xlu0 %v408, 15
    %v487 = vpop.permute.xlu0 %486
    %488 = vrot.lane.b32.xlu0 %v409, 15
    %v489 = vpop.permute.xlu0 %488
    %490 = vrot.lane.b32.xlu0 %v410, 15
    %v491 = vpop.permute.xlu0 %490
    %492 = vrot.lane.b32.xlu0 %v411, 15
    %v493 = vpop.permute.xlu0 %492
    %vm494 = vcmask 121856
    %v495 = vsel %vm494, %v483, %v485
    %v496 = vsel %vm494, %v485, %v487
    %v497 = vsel %vm494, %v489, %v491
    %v498 = vsel %vm494, %v491, %v493
    %v503 = vsel %vm474, %v495, 0.0
    %v504 = vsel %vm475, %v496, 0.0
    %v505 = vsel %vm474, %v497, 0.0
    %v506 = vsel %vm475, %v498, 0.0
    %511 = vrot.lane.b32.xlu0 %v503, 112
    %v512 = vpop.permute.xlu0 %511
    %513 = vrot.lane.b32.xlu0 %v504, 112
    %v514 = vpop.permute.xlu0 %513
    %515 = vrot.lane.b32.xlu0 %v505, 112
    %v516 = vpop.permute.xlu0 %515
    %517 = vrot.lane.b32.xlu0 %v506, 112
    %v518 = vpop.permute.xlu0 %517
    %v519 = vsel %vm158, %v512, %v514
    %v520 = vsel %vm158, %v516, %v518
    %v527 = vadd.f32 %v466, %v512
    %v528 = vadd.f32 %v467, %v519
    %v529 = vadd.f32 %v468, %v514
    %v530 = vadd.f32 %v469, %v516
    %v531 = vadd.f32 %v470, %v520
    %v532 = vadd.f32 %v471, %v518
    %v533 = vld [vmem:[%s2] sm:$0xff]
    %v534 = vld [vmem:[%s2 + $0x8] sm:$0xff]
    %536 = vset.pattern.permute.xlu0 0
    %537 = vperm.xlu0 %536, %v533
    %v538 = vpop.permute.xlu0 %537
    %541 = vset.pattern.permute.xlu0 0
    %542 = vperm.xlu0 %541, %v534
    %v543 = vpop.permute.xlu0 %542
    %v545 = vadd.f32 %v527, %v538
    %v546 = vadd.f32 %v528, %v538
    %v547 = vadd.f32 %v529, %v538
    %v548 = vadd.f32 %v530, %v543
    %v549 = vadd.f32 %v531, %v543
    %v550 = vadd.f32 %v532, %v543
    %557 = vrot.lane.b32.xlu0 %v545, 16
    %v558 = vpop.permute.xlu0 %557
    %559 = vrot.lane.b32.xlu0 %v546, 16
    %v560 = vpop.permute.xlu0 %559
    %561 = vrot.lane.b32.xlu0 %v547, 16
    %v562 = vpop.permute.xlu0 %561
    %563 = vrot.lane.b32.xlu0 %v548, 16
    %v564 = vpop.permute.xlu0 %563
    %565 = vrot.lane.b32.xlu0 %v549, 16
    %v566 = vpop.permute.xlu0 %565
    %567 = vrot.lane.b32.xlu0 %v550, 16
    %v568 = vpop.permute.xlu0 %567
    %vm569 = vcmask 130048
    %v570 = vsel %vm569, %v558, %v560
    %v571 = vsel %vm569, %v560, %v562
    %v572 = vsel %vm569, %v564, %v566
    %v573 = vsel %vm569, %v566, %v568
    %v578 = vadd.f32 %v570, %v571
    %579 = vadd.xlane.f32.xlu0 %v578
    %v580 = vpop.xlane.xlu0 %579
    %v581 = vadd.f32 %v572, %v573
    %582 = vadd.xlane.f32.xlu0 %v581
    %v583 = vpop.xlane.xlu0 %582
    %v584 = vmul.f32 %v545, %v545
    %v585 = vmul.f32 %v546, %v546
    %v586 = vmul.f32 %v547, %v547
    %v587 = vmul.f32 %v548, %v548
    %v588 = vmul.f32 %v549, %v549
    %v589 = vmul.f32 %v550, %v550
    %596 = vrot.lane.b32.xlu0 %v584, 16
    %v597 = vpop.permute.xlu0 %596
    %598 = vrot.lane.b32.xlu0 %v585, 16
    %v599 = vpop.permute.xlu0 %598
    %600 = vrot.lane.b32.xlu0 %v586, 16
    %v601 = vpop.permute.xlu0 %600
    %602 = vrot.lane.b32.xlu0 %v587, 16
    %v603 = vpop.permute.xlu0 %602
    %604 = vrot.lane.b32.xlu0 %v588, 16
    %v605 = vpop.permute.xlu0 %604
    %606 = vrot.lane.b32.xlu0 %v589, 16
    %v607 = vpop.permute.xlu0 %606
    %v608 = vsel %vm569, %v597, %v599
    %v609 = vsel %vm569, %v599, %v601
    %v610 = vsel %vm569, %v603, %v605
    %v611 = vsel %vm569, %v605, %v607
    %v616 = vadd.f32 %v608, %v609
    %617 = vadd.xlane.f32.xlu0 %v616
    %v618 = vpop.xlane.xlu0 %617
    %v619 = vadd.f32 %v610, %v611
    %620 = vadd.xlane.f32.xlu0 %v619
    %v621 = vpop.xlane.xlu0 %620
    %vm622 = vcmp.eq.s32.totalorder %v48, 0
    %v623 = vsel %vm622, 1, 0
    %vm624 = vcmp.eq.s32.totalorder %v623, 1
    %v625 = vsel %vm624, %v580, %v618
    %v626 = vsel %vm624, %v583, %v621
    %v627 = vld [vmem:[%s5] sm:$0xff]
    %v628 = vld [vmem:[%s6] sm:$0xff]
    %v629 = vld [vmem:[%s6 + $0x8] sm:$0xff]
    %v631 = vsel %vm569, %v627, 0
    %633 = vmatpush.msra.mxu0 0.0
    %634 = vmatpush.msra.mxu0 0.0
    %635 = vmatpush.msra.mxu0 0.0
    %636 = vmatpush.msra.mxu0 0.0
    %637 = vmatpush.msra.mxu0 0.0
    %638 = vmatpush.msra.mxu0 0.0
    %639 = vmatpush.msra.mxu0 0.0
    %640 = vmatpush.msra.mxu0 0.0
    %641 = vmatpush.msra.mxu0 0.0
    %642 = vmatpush.msra.mxu0 0.0
    %643 = vmatpush.msra.mxu0 0.0
    %644 = vmatpush.msra.mxu0 0.0
    %645 = vmatpush.msra.mxu0 0.0
    %646 = vmatpush.msra.mxu0 0.0
    %647 = vmatpush.msra.mxu0 %v626
    %648 = vmatpush.msra.mxu0 %v625
    %649 = vmatmul.f32.gmra.mxu0 %v631
    %v650 = vpop.f32.mrf.mxu0
    %v651 = vadd.f32 0.0, %v650
    %652 = vdwg.mxu0
    %vm653 = vcmask 64512
    %v655 = vsel %vm653, %v628, 0
    %v658 = vsel %vm653, %v629, 0
    %660 = vmatpush.msra.mxu0 0.0
    %661 = vmatpush.msra.mxu0 0.0
    %662 = vmatpush.msra.mxu0 0.0
    %663 = vmatpush.msra.mxu0 0.0
    %664 = vmatpush.msra.mxu0 0.0
    %665 = vmatpush.msra.mxu0 0.0
    %666 = vmatpush.msra.mxu0 0.0
    %667 = vmatpush.msra.mxu0 0.0
    %668 = vmatpush.msra.mxu0 0.0
    %669 = vmatpush.msra.mxu0 0.0
    %670 = vmatpush.msra.mxu0 0.0
    %671 = vmatpush.msra.mxu0 0.0
    %672 = vmatpush.msra.mxu0 0.0
    %673 = vmatpush.msra.mxu0 0.0
    %674 = vmatpush.msra.mxu0 0.0
    %675 = vmatpush.msra.mxu0 %v651
    %676 = vmatmul.f32.gmra.mxu0 %v655
    %v677 = vpop.f32.mrf.mxu0
    %v678 = vadd.f32 0.0, %v677
    %679 = vmatmul.f32.gmra.mxu0 %v658
    %v680 = vpop.f32.mrf.mxu0
    %v681 = vadd.f32 0.0, %v680
    %682 = vdwg.mxu0
    %v683 = vmul.f32 %v678, %v678
    %v684 = vmul.f32 %v681, %v681
    %687 = vrot.lane.b32.xlu0 %v683, 1
    %v688 = vpop.permute.xlu0 %687
    %689 = vrot.lane.b32.xlu0 %v684, 1
    %v690 = vpop.permute.xlu0 %689
    %v693 = vsub.f32 %v678, %v688
    %v694 = vsub.f32 %v681, %v690
    %v695 = vadd.f32 %v693, 1e-05
    %v696 = vadd.f32 %v694, 1e-05
    %v697 = vrsqrt.pop %v695
    %v698 = vmul.f32 %v697, %v695
    %v699 = vmul.f32 %v698, %v697
    %v700 = vmul.f32 0.5, %v699
    %v701 = vsub.f32 1.5, %v700
    %v702 = vmul.f32 %v697, %v701
    %vm703 = vweird.f32 %v695
    %vm704 = vweird.f32 %v697
    %vm705 = vmor %vm703, %vm704
    %v706 = vsel %vm705, %v697, %v702
    %v707 = vrsqrt.pop %v696
    %v708 = vmul.f32 %v707, %v696
    %v709 = vmul.f32 %v708, %v707
    %v710 = vmul.f32 0.5, %v709
    %v711 = vsub.f32 1.5, %v710
    %v712 = vmul.f32 %v707, %v711
    %vm713 = vweird.f32 %v696
    %vm714 = vweird.f32 %v707
    %vm715 = vmor %vm713, %vm714
    %v716 = vsel %vm715, %v707, %v712
    %v717 = vld [vmem:[%s3] sm:$0xff]
    %v718 = vld [vmem:[%s3 + $0x8] sm:$0xff]
    %v719 = vld [vmem:[%s4] sm:$0xff]
    %v720 = vld [vmem:[%s4 + $0x8] sm:$0xff]
    %722 = vset.pattern.permute.xlu0 0
    %723 = vperm.xlu0 %722, %v678
    %v724 = vpop.permute.xlu0 %723
    %727 = vset.pattern.permute.xlu0 0
    %728 = vperm.xlu0 %727, %v681
    %v729 = vpop.permute.xlu0 %728
    %v731 = vsub.f32 %v545, %v724
    %v732 = vsub.f32 %v546, %v724
    %v733 = vsub.f32 %v547, %v724
    %v734 = vsub.f32 %v548, %v729
    %v735 = vsub.f32 %v549, %v729
    %v736 = vsub.f32 %v550, %v729
    %739 = vrot.lane.b32.xlu0 %v717, 1
    %v740 = vpop.permute.xlu0 %739
    %741 = vrot.lane.b32.xlu0 %v718, 1
    %v742 = vpop.permute.xlu0 %741
    %v745 = vmul.f32 %v706, %v740
    %v746 = vmul.f32 %v716, %v742
    %748 = vset.pattern.permute.xlu0 1
    %749 = vperm.xlu0 %748, %v745
    %v750 = vpop.permute.xlu0 %749
    %753 = vset.pattern.permute.xlu0 1
    %754 = vperm.xlu0 %753, %v746
    %v755 = vpop.permute.xlu0 %754
    %v757 = vmul.f32 %v731, %v750
    %v758 = vmul.f32 %v732, %v750
    %v759 = vmul.f32 %v733, %v750
    %v760 = vmul.f32 %v734, %v755
    %v761 = vmul.f32 %v735, %v755
    %v762 = vmul.f32 %v736, %v755
    %764 = vset.pattern.permute.xlu0 0
    %765 = vperm.xlu0 %764, %v719
    %v766 = vpop.permute.xlu0 %765
    %769 = vset.pattern.permute.xlu0 0
    %770 = vperm.xlu0 %769, %v720
    %v771 = vpop.permute.xlu0 %770
    %v773 = vadd.f32 %v757, %v766
    %v774 = vadd.f32 %v758, %v766
    %v775 = vadd.f32 %v759, %v766
    %v776 = vadd.f32 %v760, %v771
    %v777 = vadd.f32 %v761, %v771
    %v778 = vadd.f32 %v762, %v771
    %v779 = vld [vmem:[%s7] sm:$0xff]
    %v780 = vld [vmem:[%s8] sm:$0xff]
    %782 = vset.pattern.permute.xlu0 0
    %783 = vperm.xlu0 %782, %v780
    %v784 = vpop.permute.xlu0 %783
    %789 = vrot.lane.b32.xlu0 %v773, 16
    %v790 = vpop.permute.xlu0 %789
    %791 = vrot.lane.b32.xlu0 %v774, 16
    %v792 = vpop.permute.xlu0 %791
    %793 = vrot.lane.b32.xlu0 %v775, 16
    %v794 = vpop.permute.xlu0 %793
    %v795 = vsel %vm569, %v790, %v792
    %v796 = vsel %vm569, %v792, %v794
    %v800 = vsel %vm653, %v779, 0
    %802 = vmatpush.msra.mxu0 0.0
    %803 = vmatpush.msra.mxu0 0.0
    %804 = vmatpush.msra.mxu0 0.0
    %805 = vmatpush.msra.mxu0 0.0
    %806 = vmatpush.msra.mxu0 0.0
    %807 = vmatpush.msra.mxu0 0.0
    %808 = vmatpush.msra.mxu0 0.0
    %809 = vmatpush.msra.mxu0 0.0
    %810 = vmatpush.msra.mxu0 0.0
    %811 = vmatpush.msra.mxu0 0.0
    %812 = vmatpush.msra.mxu0 0.0
    %813 = vmatpush.msra.mxu0 0.0
    %814 = vmatpush.msra.mxu0 0.0
    %815 = vmatpush.msra.mxu0 0.0
    %816 = vmatpush.msra.mxu0 0.0
    %817 = vmatpush.msra.mxu0 %v795
    %818 = vmatmul.f32.gmra.mxu0 %v800
    %v819 = vpop.f32.mrf.mxu0
    %v820 = vadd.f32 %v784, %v819
    %821 = vdwg.mxu0
    %822 = vmatpush.msra.mxu0 0.0
    %823 = vmatpush.msra.mxu0 0.0
    %824 = vmatpush.msra.mxu0 0.0
    %825 = vmatpush.msra.mxu0 0.0
    %826 = vmatpush.msra.mxu0 0.0
    %827 = vmatpush.msra.mxu0 0.0
    %828 = vmatpush.msra.mxu0 0.0
    %829 = vmatpush.msra.mxu0 0.0
    %830 = vmatpush.msra.mxu0 0.0
    %831 = vmatpush.msra.mxu0 0.0
    %832 = vmatpush.msra.mxu0 0.0
    %833 = vmatpush.msra.mxu0 0.0
    %834 = vmatpush.msra.mxu0 0.0
    %835 = vmatpush.msra.mxu0 0.0
    %836 = vmatpush.msra.mxu0 0.0
    %837 = vmatpush.msra.mxu0 %v796
    %838 = vmatmul.f32.gmra.mxu0 %v800
    %v839 = vpop.f32.mrf.mxu0
    %v840 = vadd.f32 %v784, %v839
    %841 = vdwg.mxu0
    %842 = vst [vmem:[#allocation3] sm:$0xff] %v820
    %843 = vst [vmem:[#allocation3 + $0x8] sm:$0xff] %v840
    %847 = vrot.lane.b32.xlu0 %v776, 16
    %v848 = vpop.permute.xlu0 %847
    %849 = vrot.lane.b32.xlu0 %v777, 16
    %v850 = vpop.permute.xlu0 %849
    %851 = vrot.lane.b32.xlu0 %v778, 16
    %v852 = vpop.permute.xlu0 %851
    %v853 = vsel %vm569, %v848, %v850
    %v854 = vsel %vm569, %v850, %v852
    %857 = vmatpush.msra.mxu0 0.0
    %858 = vmatpush.msra.mxu0 0.0
    %859 = vmatpush.msra.mxu0 0.0
    %860 = vmatpush.msra.mxu0 0.0
    %861 = vmatpush.msra.mxu0 0.0
    %862 = vmatpush.msra.mxu0 0.0
    %863 = vmatpush.msra.mxu0 0.0
    %864 = vmatpush.msra.mxu0 0.0
    %865 = vmatpush.msra.mxu0 0.0
    %866 = vmatpush.msra.mxu0 0.0
    %867 = vmatpush.msra.mxu0 0.0
    %868 = vmatpush.msra.mxu0 0.0
    %869 = vmatpush.msra.mxu0 0.0
    %870 = vmatpush.msra.mxu0 0.0
    %871 = vmatpush.msra.mxu0 0.0
    %872 = vmatpush.msra.mxu0 %v853
    %873 = vmatmul.f32.gmra.mxu0 %v800
    %v874 = vpop.f32.mrf.mxu0
    %v875 = vadd.f32 %v784, %v874
    %876 = vdwg.mxu0
    %877 = vmatpush.msra.mxu0 0.0
    %878 = vmatpush.msra.mxu0 0.0
    %879 = vmatpush.msra.mxu0 0.0
    %880 = vmatpush.msra.mxu0 0.0
    %881 = vmatpush.msra.mxu0 0.0
    %882 = vmatpush.msra.mxu0 0.0
    %883 = vmatpush.msra.mxu0 0.0
    %884 = vmatpush.msra.mxu0 0.0
    %885 = vmatpush.msra.mxu0 0.0
    %886 = vmatpush.msra.mxu0 0.0
    %887 = vmatpush.msra.mxu0 0.0
    %888 = vmatpush.msra.mxu0 0.0
    %889 = vmatpush.msra.mxu0 0.0
    %890 = vmatpush.msra.mxu0 0.0
    %891 = vmatpush.msra.mxu0 0.0
    %892 = vmatpush.msra.mxu0 %v854
    %893 = vmatmul.f32.gmra.mxu0 %v800
    %v894 = vpop.f32.mrf.mxu0
    %v895 = vadd.f32 %v784, %v894
    %896 = vdwg.mxu0
    %897 = vst [vmem:[#allocation3 + $0x10] sm:$0xff] %v875
    %898 = vst [vmem:[#allocation3 + $0x18] sm:$0xff] %v895
    // Predicated region
    $region38: #{tpu_custom_call.1} parent=1 // pred_check
      _
    $region39: #{tpu_custom_call.1} parent=1 // pred_check_branch
      %900 = sbr.rel (0) target = $region41
    $region40: #{tpu_custom_call.1} parent=1 // pred_region
      %902 = vsyncadd [#allocation4], 0
      %s903 = sshll.u32 [#allocation3], 4
      %s904 = int_to_ptr.vmem [resolvable:$true] %s903
      %s905 = sshll.u32 %s9, 4
      %s906 = int_to_ptr.hbm [resolvable:$true] %s905
      %911 = dma.vmem_to_hbm [thread:$0]  %s904, 512, %s906, [#allocation4], 256, 256, 16
    $region41: #{tpu_custom_call.1} parent=1 // pred_fallthru
      _
    // Predicated region
    $region42: #{tpu_custom_call.1} parent=1 // pred_check
      _
    $region43: #{tpu_custom_call.1} parent=1 // pred_check_branch
      %913 = sbr.rel (0) target = $region45
    $region44: #{tpu_custom_call.1} parent=1 // pred_region
      %915 = dma.done [#allocation4], 512
    $region45: #{tpu_custom_call.1} parent=1 // pred_fallthru
      _
    %916 = vsyncpa [#allocation4], 1

</llo_original>
